<compile_context>
chip_gen: v7x
topology: tpu7x:2x2x1
jax: 0.10.0
libtpu: 0.0.40
codegen_flags: <defaults>
</compile_context>

<pallas_src>
import functools

import jax
import jax.numpy as jnp
from jax.experimental import pallas as pl
from jax.experimental.pallas import tpu as pltpu

LN_EPS = 1e-5


def _round_up(x, m):
    return ((x + m - 1) // m) * m


def _patch_embed_kernel(x_ref, w_ref, b_ref, *refs, use_norm, use_fma):
    # x_ref: (TM, C), w_ref: (C, E), b_ref: (1, E)
    # refs: (gamma_ref, beta_ref, o_ref) if use_norm else (o_ref,)
    if use_norm:
        g_ref, beta_ref, o_ref = refs
    else:
        (o_ref,) = refs

    bias = b_ref[...].astype(jnp.float32)                   # (1, E)

    if use_fma:
        # Tiny contraction dim: unrolled VPU FMA, skip the MXU entirely.
        x = x_ref[...].astype(jnp.float32)                   # (TM, C)
        w = w_ref[...].astype(jnp.float32)                   # (C, E)
        c_dim = x.shape[1]
        acc = x[:, 0:1] * w[0:1, :]
        for c in range(1, c_dim):
            acc = acc + x[:, c:c + 1] * w[c:c + 1, :]
        y = acc + bias
    else:
        y = jnp.dot(x_ref[...], w_ref[...],
                    preferred_element_type=jnp.float32) + bias

    if use_norm:
        mean = jnp.mean(y, axis=-1, keepdims=True)
        centered = y - mean
        var = jnp.mean(centered * centered, axis=-1, keepdims=True)
        inv = jax.lax.rsqrt(var + LN_EPS)
        y = (centered * inv) * g_ref[...].astype(jnp.float32) \
            + beta_ref[...].astype(jnp.float32)

    o_ref[...] = y.astype(o_ref.dtype)


def patch_embed_1d(x, w, b, gamma=None, beta=None, *, tm=1024, out_dtype=None):
    """PatchEmbed1D forward.

    x: (B, L, C); w: Conv1d weight (E, C) or (E, C, 1); b: (E,).
    gamma/beta: optional LayerNorm(E) affine params.
    out_dtype: output dtype (defaults to x.dtype; pass jnp.bfloat16 to halve
               output HBM traffic when the consumer allows it).
    """
    B, L, C = x.shape
    if w.ndim == 3:          # raw Conv1d weight (E, C, 1)
        w = w[..., 0]
    E = w.shape[0]
    use_norm = gamma is not None
    use_fma = C <= 16
    out_dtype = x.dtype if out_dtype is None else jnp.dtype(out_dtype)

    rows = B * L

    # --- row-tile selection -------------------------------------------------
    # Big tiles (per-grid-step overhead ~0.35us), but never larger than the
    # (8-rounded) row count, and keep >=2 grid steps when possible so the
    # "parallel" axis actually shards across v7x's two TensorCores.
    tm_eff = max(8, min(int(tm), _round_up(rows, 8)))
    if pl.cdiv(rows, tm_eff) < 2 and rows > 8:
        tm_eff = _round_up(pl.cdiv(rows, 2), 8)
    rows_p = _round_up(rows, tm_eff)
    grid = rows_p // tm_eff

    # --- operand prep (cheap / no-op reshapes; pad rows only if needed) ------
    x2 = x.reshape(rows, C)
    if rows_p != rows:
        x2 = jnp.pad(x2, ((0, rows_p - rows), (0, 0)))
    wT = jnp.transpose(w)                      # (C, E)
    b2 = b.reshape(1, E)

    # Deeper input buffering only pays off once the pipeline is deep.
    if grid >= 4:
        x_spec = pl.BlockSpec((tm_eff, C), lambda i: (i, 0),
                              pipeline_mode=pl.Buffered(3))
    else:
        x_spec = pl.BlockSpec((tm_eff, C), lambda i: (i, 0))

    args = [x2, wT, b2]
    in_specs = [
        x_spec,                                             # x rows tile
        pl.BlockSpec((C, E), lambda i: (0, 0)),             # full weight (resident)
        pl.BlockSpec((1, E), lambda i: (0, 0)),             # bias
    ]
    if use_norm:
        args += [gamma.reshape(1, E), beta.reshape(1, E)]
        in_specs += [
            pl.BlockSpec((1, E), lambda i: (0, 0)),         # ln gamma
            pl.BlockSpec((1, E), lambda i: (0, 0)),         # ln beta
        ]

    # Explicit VMEM budget: double/triple-buffered in/out tiles + resident
    # params + headroom, capped at 48 MiB (safe on v7x's 64 MiB physical VMEM).
    est = (4 * tm_eff * (C * jnp.dtype(x.dtype).itemsize
                         + E * jnp.dtype(out_dtype).itemsize)
           + 8 * E * (C + 4) * 4 + (2 << 20))
    vmem_limit = int(min(max(est, 16 << 20), 48 << 20))

    out2 = pl.pallas_call(
        functools.partial(_patch_embed_kernel,
                          use_norm=use_norm, use_fma=use_fma),
        out_shape=jax.ShapeDtypeStruct((rows_p, E), out_dtype),
        grid_spec=pltpu.PrefetchScalarGridSpec(
            num_scalar_prefetch=0,
            grid=(grid,),
            in_specs=in_specs,
            out_specs=pl.BlockSpec((tm_eff, E), lambda i: (i, 0)),
        ),
        compiler_params=pltpu.CompilerParams(
            dimension_semantics=("parallel",),
            vmem_limit_bytes=vmem_limit),
    )(*args)

    if rows_p != rows:
        out2 = out2[:rows]
    return out2.reshape(B, L, E)


def _reference(x, w, b, gamma, beta):
    # mirrors: proj (conv1d k=1) then LayerNorm over embed_dim, full-f32 math
    y = jnp.einsum("blc,ec->ble", x, w,
                   precision=jax.lax.Precision.HIGHEST) + b
    if gamma is not None:
        mean = jnp.mean(y, axis=-1, keepdims=True)
        var = jnp.mean(jnp.square(y - mean), axis=-1, keepdims=True)
        y = (y - mean) * jax.lax.rsqrt(var + LN_EPS) * gamma + beta
    return y


if __name__ == "__main__":
    key = jax.random.PRNGKey(0)
    B, L, C, E = 2, 32, 4, 32   # batch, seq (num_patches), in_chans, embed_dim

    k_x, k_w, k_b, k_g, k_be = jax.random.split(key, 5)
    x = jax.random.normal(k_x, (B, L, C), dtype=jnp.float32)
    # Conv1d(in_chans=C, embed_dim=E, kernel_size=1) weight is (E, C, 1); squeeze k dim.
    w = jax.random.normal(k_w, (E, C), dtype=jnp.float32) * 0.1
    b = jax.random.normal(k_b, (E,), dtype=jnp.float32) * 0.1
    # norm_layer = LayerNorm(embed_dim); deterministic non-trivial affine params.
    gamma = 1.0 + 0.05 * jax.random.normal(k_g, (E,), dtype=jnp.float32)
    beta = 0.05 * jax.random.normal(k_be, (E,), dtype=jnp.float32)

    out = patch_embed_1d(x, w, b, gamma, beta)
    out = jax.block_until_ready(out)

    ref = _reference(x, w, b, gamma, beta)
    assert out.shape == (B, L, E)
    assert jnp.allclose(out, ref, atol=1e-5, rtol=1e-5), "mismatch vs reference"

    # also exercise the no-norm path (Conv1d projection only)
    out_nn = jax.block_until_ready(patch_embed_1d(x, w, b))
    ref_nn = _reference(x, w, b, None, None)
    assert jnp.allclose(out_nn, ref_nn, atol=1e-5, rtol=1e-5), "mismatch (no norm)"

    print("KERNEL_OK")
</pallas_src>

<mosaic_0001>
module attributes {stable_mosaic.version = 11 : i64} {
  func.func @_patch_embed_kernel(%arg0: i32, %arg1: memref<32x4xf32, #tpu.memory_space<vmem>>, %arg2: memref<4x32xf32, #tpu.memory_space<vmem>>, %arg3: memref<1x32xf32, #tpu.memory_space<vmem>>, %arg4: memref<1x32xf32, #tpu.memory_space<vmem>>, %arg5: memref<1x32xf32, #tpu.memory_space<vmem>>, %arg6: memref<32x32xf32, #tpu.memory_space<vmem>>) attributes {dimension_semantics = [#tpu.dimension_semantics<parallel>], iteration_bounds = array<i64: 2>, scalar_prefetch = 0 : i64, scratch_operands = 0 : i64, tpu.core_type = #tpu.core_type<tc>, window_params = [{transform_indices = @transform_0, window_bounds = array<i64: 32, 4>}, {pipeline_mode = #tpu.pipeline_mode<synchronous>, transform_indices = @transform_1, window_bounds = array<i64: 4, 32>}, {pipeline_mode = #tpu.pipeline_mode<synchronous>, transform_indices = @transform_2, window_bounds = array<i64: 1, 32>}, {pipeline_mode = #tpu.pipeline_mode<synchronous>, transform_indices = @transform_3, window_bounds = array<i64: 1, 32>}, {pipeline_mode = #tpu.pipeline_mode<synchronous>, transform_indices = @transform_4, window_bounds = array<i64: 1, 32>}, {transform_indices = @transform_5, window_bounds = array<i64: 32, 32>}]} {
    %c0 = arith.constant 0 : index
    %c0_0 = arith.constant 0 : index
    %0 = vector.load %arg3[%c0, %c0_0] : memref<1x32xf32, #tpu.memory_space<vmem>>, vector<1x32xf32>
    %c0_1 = arith.constant 0 : index
    %c0_2 = arith.constant 0 : index
    %1 = vector.load %arg1[%c0_1, %c0_2] : memref<32x4xf32, #tpu.memory_space<vmem>>, vector<32x4xf32>
    %c0_3 = arith.constant 0 : index
    %c0_4 = arith.constant 0 : index
    %2 = vector.load %arg2[%c0_3, %c0_4] : memref<4x32xf32, #tpu.memory_space<vmem>>, vector<4x32xf32>
    %3 = vector.extract_strided_slice %1 {offsets = [0, 0], sizes = [32, 1], strides = [1, 1]} : vector<32x4xf32> to vector<32x1xf32>
    %4 = vector.extract_strided_slice %2 {offsets = [0, 0], sizes = [1, 32], strides = [1, 1]} : vector<4x32xf32> to vector<1x32xf32>
    %5 = vector.broadcast %3 : vector<32x1xf32> to vector<32x32xf32>
    %6 = vector.broadcast %4 : vector<1x32xf32> to vector<32x32xf32>
    %7 = arith.mulf %5, %6 : vector<32x32xf32>
    %8 = vector.extract_strided_slice %1 {offsets = [0, 1], sizes = [32, 1], strides = [1, 1]} : vector<32x4xf32> to vector<32x1xf32>
    %9 = vector.extract_strided_slice %2 {offsets = [1, 0], sizes = [1, 32], strides = [1, 1]} : vector<4x32xf32> to vector<1x32xf32>
    %10 = vector.broadcast %8 : vector<32x1xf32> to vector<32x32xf32>
    %11 = vector.broadcast %9 : vector<1x32xf32> to vector<32x32xf32>
    %12 = arith.mulf %10, %11 : vector<32x32xf32>
    %13 = arith.addf %7, %12 : vector<32x32xf32>
    %14 = vector.extract_strided_slice %1 {offsets = [0, 2], sizes = [32, 1], strides = [1, 1]} : vector<32x4xf32> to vector<32x1xf32>
    %15 = vector.extract_strided_slice %2 {offsets = [2, 0], sizes = [1, 32], strides = [1, 1]} : vector<4x32xf32> to vector<1x32xf32>
    %16 = vector.broadcast %14 : vector<32x1xf32> to vector<32x32xf32>
    %17 = vector.broadcast %15 : vector<1x32xf32> to vector<32x32xf32>
    %18 = arith.mulf %16, %17 : vector<32x32xf32>
    %19 = arith.addf %13, %18 : vector<32x32xf32>
    %20 = vector.extract_strided_slice %1 {offsets = [0, 3], sizes = [32, 1], strides = [1, 1]} : vector<32x4xf32> to vector<32x1xf32>
    %21 = vector.extract_strided_slice %2 {offsets = [3, 0], sizes = [1, 32], strides = [1, 1]} : vector<4x32xf32> to vector<1x32xf32>
    %22 = vector.broadcast %20 : vector<32x1xf32> to vector<32x32xf32>
    %23 = vector.broadcast %21 : vector<1x32xf32> to vector<32x32xf32>
    %24 = arith.mulf %22, %23 : vector<32x32xf32>
    %25 = arith.addf %19, %24 : vector<32x32xf32>
    %26 = vector.broadcast %0 : vector<1x32xf32> to vector<32x32xf32>
    %27 = arith.addf %25, %26 : vector<32x32xf32>
    %cst = arith.constant dense<0.000000e+00> : vector<32xf32>
    %28 = vector.multi_reduction <add>, %27, %cst [1] : vector<32x32xf32> to vector<32xf32>
    %29 = vector.shape_cast %28 : vector<32xf32> to vector<32x1xf32>
    %cst_5 = arith.constant 3.200000e+01 : f32
    %30 = vector.broadcast %cst_5 : f32 to vector<32x1xf32>
    %31 = arith.divf %29, %30 : vector<32x1xf32>
    %32 = vector.broadcast %31 : vector<32x1xf32> to vector<32x32xf32>
    %33 = arith.subf %27, %32 : vector<32x32xf32>
    %34 = arith.mulf %33, %33 : vector<32x32xf32>
    %cst_6 = arith.constant dense<0.000000e+00> : vector<32xf32>
    %35 = vector.multi_reduction <add>, %34, %cst_6 [1] : vector<32x32xf32> to vector<32xf32>
    %36 = vector.shape_cast %35 : vector<32xf32> to vector<32x1xf32>
    %cst_7 = arith.constant 3.200000e+01 : f32
    %37 = vector.broadcast %cst_7 : f32 to vector<32x1xf32>
    %38 = arith.divf %36, %37 : vector<32x1xf32>
    %cst_8 = arith.constant 9.99999974E-6 : f32
    %39 = vector.broadcast %cst_8 : f32 to vector<32x1xf32>
    %40 = arith.addf %38, %39 : vector<32x1xf32>
    %41 = math.rsqrt %40 : vector<32x1xf32>
    %42 = vector.broadcast %41 : vector<32x1xf32> to vector<32x32xf32>
    %43 = arith.mulf %33, %42 : vector<32x32xf32>
    %c0_9 = arith.constant 0 : index
    %c0_10 = arith.constant 0 : index
    %44 = vector.load %arg4[%c0_9, %c0_10] : memref<1x32xf32, #tpu.memory_space<vmem>>, vector<1x32xf32>
    %45 = vector.broadcast %44 : vector<1x32xf32> to vector<32x32xf32>
    %46 = arith.mulf %43, %45 : vector<32x32xf32>
    %c0_11 = arith.constant 0 : index
    %c0_12 = arith.constant 0 : index
    %47 = vector.load %arg5[%c0_11, %c0_12] : memref<1x32xf32, #tpu.memory_space<vmem>>, vector<1x32xf32>
    %48 = vector.broadcast %47 : vector<1x32xf32> to vector<32x32xf32>
    %49 = arith.addf %46, %48 : vector<32x32xf32>
    %c0_13 = arith.constant 0 : index
    %c0_14 = arith.constant 0 : index
    %50 = vector.load %arg6[%c0_13, %c0_14] : memref<32x32xf32, #tpu.memory_space<vmem>>, vector<32x32xf32>
    tpu.vector_store %arg6[%c0_13, %c0_14], %49 {strides = array<i32>} : memref<32x32xf32, #tpu.memory_space<vmem>>, vector<32x32xf32>,
    return
  }
  func.func @transform_0(%arg0: i32) -> (i32, i32) {
    %c0_i32 = arith.constant 0 : i32
    %c0_i32_0 = arith.constant 0 : i32
    return %arg0, %c0_i32 : i32, i32
  }
  func.func @transform_1(%arg0: i32) -> (i32, i32) {
    %c0_i32 = arith.constant 0 : i32
    %c0_i32_0 = arith.constant 0 : i32
    %c0_i32_1 = arith.constant 0 : i32
    return %c0_i32, %c0_i32_0 : i32, i32
  }
  func.func @transform_2(%arg0: i32) -> (i32, i32) {
    %c0_i32 = arith.constant 0 : i32
    %c0_i32_0 = arith.constant 0 : i32
    %c0_i32_1 = arith.constant 0 : i32
    return %c0_i32, %c0_i32_0 : i32, i32
  }
  func.func @transform_3(%arg0: i32) -> (i32, i32) {
    %c0_i32 = arith.constant 0 : i32
    %c0_i32_0 = arith.constant 0 : i32
    %c0_i32_1 = arith.constant 0 : i32
    return %c0_i32, %c0_i32_0 : i32, i32
  }
  func.func @transform_4(%arg0: i32) -> (i32, i32) {
    %c0_i32 = arith.constant 0 : i32
    %c0_i32_0 = arith.constant 0 : i32
    %c0_i32_1 = arith.constant 0 : i32
    return %c0_i32, %c0_i32_0 : i32, i32
  }
  func.func @transform_5(%arg0: i32) -> (i32, i32) {
    %c0_i32 = arith.constant 0 : i32
    %c0_i32_0 = arith.constant 0 : i32
    return %arg0, %c0_i32 : i32, i32
  }
}

</mosaic_0001>

<llo_original>
// kernel: tpu_custom_call.1
$region0: #{tpu_custom_call.1}
  #allocation0 [shape = 'u32[]', space=smem, size = 0x4, offset = 0x4, fixed_abs, tag = 'smem constant byte address 0x4 - core index']
  #allocation1 [shape = 'u32[144,128]{1,0:T(1,128)}', space=vmem, size = 0x12000, scoped, tag = 'internal scratch']
  %s0 = inlined_call_operand.vmem [shape: f32[64,4], index: 0, kind: input, shape index: {}]
  %s1 = inlined_call_operand.vmem [shape: f32[4,32], index: 1, kind: input, shape index: {}]
  %s2 = inlined_call_operand.vmem [shape: f32[1,32], index: 2, kind: input, shape index: {}]
  %s3 = inlined_call_operand.vmem [shape: f32[1,32], index: 3, kind: input, shape index: {}]
  %s4 = inlined_call_operand.vmem [shape: f32[1,32], index: 4, kind: input, shape index: {}]
  %s5 = inlined_call_operand.vmem [shape: f32[64,32], index: 5, kind: output, shape index: {}]
  %s6 = sld [smem:[#allocation0]]
  $region53: #{tpu_custom_call.1} parent=0
    _
  %s8 = ssub.s32 1, %s6
  %s9 = scalar_select 0, %s8, %s6
  loop: start=0, step=1, limit=4
  $region2: #{tpu_custom_call.1} parent=0 // loop_pre_header
    _
  $region3: #{tpu_custom_call.1} parent=0 // loop_header
    %s11 = sphi 0, %s15
    %p12 = scmp.ge.s32.totalorder %s11, 4
    %s21 = sphi 0, %s23
    %s24 = sphi 0, %s21
    %s25 = sphi 0, %s24
    %s41 = sphi 0, %s25
    %s45 = sphi 0, %s45
    %s47 = sphi 0, %s45
    %s48 = sphi 0, %s47
    %s62 = sphi 0, %s48
    %s66 = sphi 0, %s66
    %s68 = sphi 0, %s66
    %s69 = sphi 0, %s68
    %s83 = sphi 0, %s69
    %s87 = sphi 0, %s87
    %s89 = sphi 0, %s87
    %s90 = sphi 0, %s89
    %s104 = sphi 0, %s90
    %s108 = sphi 0, %s108
    %s110 = sphi 0, %s108
    %s111 = sphi 0, %s110
    %s125 = sphi 0, %s111
    %s131 = sphi 0, %s133
    %s134 = sphi 0, %s131
    %s135 = sphi 0, %s134
    %s151 = sphi 0, %s135
  $region4: #{tpu_custom_call.1} parent=0 // loop_header_branch
    %14 = sbr.rel (%p12) target = $region8
  $region5: #{tpu_custom_call.1} parent=0 // loop_body
    %s16 = ssub.s32 %s11, 1
    %s17 = ssub.s32 %s11, 2
    %s18 = sadd.s32 %s11, 1
    %s19 = ssub.s32 %s11, %s18
    %p20 = scmp.eq.s32.totalorder %s19, 0
    %s22 = sadd.s32 %s21, 1
    %s23 = scalar_select %p20, %s21, %s22
    %p26 = pneg %p20
    %p27 = scmp.eq.s32.totalorder %s11, 1
    %p28 = por %p26, %p27
    %p29 = scmp.ne.s32.totalorder %s21, %s24
    %p30 = scmp.eq.s32.totalorder %s11, 0
    %p31 = por %p29, %p30
    %p32 = scmp.ne.s32.totalorder %s21, %s24
    %p33 = scmp.eq.s32.totalorder %s16, 1
    %p34 = por %p32, %p33
    %p35 = scmp.ne.s32.totalorder %s24, %s25
    %p36 = scmp.eq.s32.totalorder %s16, 0
    %p37 = por %p35, %p36
    %p38 = scmp.ne.s32.totalorder %s24, %s25
    %p39 = scmp.eq.s32.totalorder %s17, 1
    %p40 = por %p38, %p39
    %p42 = scmp.ne.s32.totalorder %s25, %s41
    %p43 = scmp.eq.s32.totalorder %s17, 0
    %p44 = por %p42, %p43
    %s46 = sadd.s32 %s45, 1
    %p49 = scmp.eq.s32.totalorder %s11, 1
    %p50 = scmp.ne.s32.totalorder %s45, %s47
    %p51 = scmp.eq.s32.totalorder %s11, 0
    %p52 = por %p50, %p51
    %p53 = scmp.ne.s32.totalorder %s45, %s47
    %p54 = scmp.eq.s32.totalorder %s16, 1
    %p55 = por %p53, %p54
    %p56 = scmp.ne.s32.totalorder %s47, %s48
    %p57 = scmp.eq.s32.totalorder %s16, 0
    %p58 = por %p56, %p57
    %p59 = scmp.ne.s32.totalorder %s47, %s48
    %p60 = scmp.eq.s32.totalorder %s17, 1
    %p61 = por %p59, %p60
    %p63 = scmp.ne.s32.totalorder %s48, %s62
    %p64 = scmp.eq.s32.totalorder %s17, 0
    %p65 = por %p63, %p64
    %s67 = sadd.s32 %s66, 1
    %p70 = scmp.eq.s32.totalorder %s11, 1
    %p71 = scmp.ne.s32.totalorder %s66, %s68
    %p72 = scmp.eq.s32.totalorder %s11, 0
    %p73 = por %p71, %p72
    %p74 = scmp.ne.s32.totalorder %s66, %s68
    %p75 = scmp.eq.s32.totalorder %s16, 1
    %p76 = por %p74, %p75
    %p77 = scmp.ne.s32.totalorder %s68, %s69
    %p78 = scmp.eq.s32.totalorder %s16, 0
    %p79 = por %p77, %p78
    %p80 = scmp.ne.s32.totalorder %s68, %s69
    %p81 = scmp.eq.s32.totalorder %s17, 1
    %p82 = por %p80, %p81
    %p84 = scmp.ne.s32.totalorder %s69, %s83
    %p85 = scmp.eq.s32.totalorder %s17, 0
    %p86 = por %p84, %p85
    %s88 = sadd.s32 %s87, 1
    %p91 = scmp.eq.s32.totalorder %s11, 1
    %p92 = scmp.ne.s32.totalorder %s87, %s89
    %p93 = scmp.eq.s32.totalorder %s11, 0
    %p94 = por %p92, %p93
    %p95 = scmp.ne.s32.totalorder %s87, %s89
    %p96 = scmp.eq.s32.totalorder %s16, 1
    %p97 = por %p95, %p96
    %p98 = scmp.ne.s32.totalorder %s89, %s90
    %p99 = scmp.eq.s32.totalorder %s16, 0
    %p100 = por %p98, %p99
    %p101 = scmp.ne.s32.totalorder %s89, %s90
    %p102 = scmp.eq.s32.totalorder %s17, 1
    %p103 = por %p101, %p102
    %p105 = scmp.ne.s32.totalorder %s90, %s104
    %p106 = scmp.eq.s32.totalorder %s17, 0
    %p107 = por %p105, %p106
    %s109 = sadd.s32 %s108, 1
    %p112 = scmp.eq.s32.totalorder %s11, 1
    %p113 = scmp.ne.s32.totalorder %s108, %s110
    %p114 = scmp.eq.s32.totalorder %s11, 0
    %p115 = por %p113, %p114
    %p116 = scmp.ne.s32.totalorder %s108, %s110
    %p117 = scmp.eq.s32.totalorder %s16, 1
    %p118 = por %p116, %p117
    %p119 = scmp.ne.s32.totalorder %s110, %s111
    %p120 = scmp.eq.s32.totalorder %s16, 0
    %p121 = por %p119, %p120
    %p122 = scmp.ne.s32.totalorder %s110, %s111
    %p123 = scmp.eq.s32.totalorder %s17, 1
    %p124 = por %p122, %p123
    %p126 = scmp.ne.s32.totalorder %s111, %s125
    %p127 = scmp.eq.s32.totalorder %s17, 0
    %p128 = por %p126, %p127
    %s129 = ssub.s32 %s11, %s18
    %p130 = scmp.eq.s32.totalorder %s129, 0
    %s132 = sadd.s32 %s131, 1
    %s133 = scalar_select %p130, %s131, %s132
    %p136 = pneg %p130
    %p137 = scmp.eq.s32.totalorder %s11, 1
    %p138 = por %p136, %p137
    %p139 = scmp.ne.s32.totalorder %s131, %s134
    %p140 = scmp.eq.s32.totalorder %s11, 0
    %p141 = por %p139, %p140
    %p142 = scmp.ne.s32.totalorder %s131, %s134
    %p143 = scmp.eq.s32.totalorder %s16, 1
    %p144 = por %p142, %p143
    %p145 = scmp.ne.s32.totalorder %s134, %s135
    %p146 = scmp.eq.s32.totalorder %s16, 0
    %p147 = por %p145, %p146
    %p148 = scmp.ne.s32.totalorder %s134, %s135
    %p149 = scmp.eq.s32.totalorder %s17, 1
    %p150 = por %p148, %p149
    %p152 = scmp.ne.s32.totalorder %s135, %s151
    %p153 = scmp.eq.s32.totalorder %s17, 0
    %p154 = por %p152, %p153
    %p155 = scmp.le.s32.totalorder 1, %s11
    %p156 = scmp.lt.s32.totalorder %s11, 3
    %p157 = pnand %p155, %p156
    %p158 = pneg %p157
    // Predicated region
    $region9: #{tpu_custom_call.1} parent=5 // pred_check
      _
    $region10: #{tpu_custom_call.1} parent=5 // pred_check_branch
      %160 = sbr.rel (%p157) target = $region12
    $region11: #{tpu_custom_call.1} parent=5 // pred_region
      %s161 = ssub.s32 %s11, 1
      // Predicated region
      $region13: #{tpu_custom_call.1} parent=11 // pred_check
        %p162 = pneg %p58
      $region14: #{tpu_custom_call.1} parent=11 // pred_check_branch
        %164 = sbr.rel (%p162) target = $region16
      $region15: #{tpu_custom_call.1} parent=11 // pred_region
        _
      $region16: #{tpu_custom_call.1} parent=11 // pred_fallthru
        _
      // Predicated region
      $region17: #{tpu_custom_call.1} parent=11 // pred_check
        %p165 = pneg %p79
      $region18: #{tpu_custom_call.1} parent=11 // pred_check_branch
        %167 = sbr.rel (%p165) target = $region20
      $region19: #{tpu_custom_call.1} parent=11 // pred_region
        _
      $region20: #{tpu_custom_call.1} parent=11 // pred_fallthru
        _
      // Predicated region
      $region21: #{tpu_custom_call.1} parent=11 // pred_check
        %p168 = pneg %p100
      $region22: #{tpu_custom_call.1} parent=11 // pred_check_branch
        %170 = sbr.rel (%p168) target = $region24
      $region23: #{tpu_custom_call.1} parent=11 // pred_region
        _
      $region24: #{tpu_custom_call.1} parent=11 // pred_fallthru
        _
      // Predicated region
      $region25: #{tpu_custom_call.1} parent=11 // pred_check
        %p171 = pneg %p121
      $region26: #{tpu_custom_call.1} parent=11 // pred_check_branch
        %173 = sbr.rel (%p171) target = $region28
      $region27: #{tpu_custom_call.1} parent=11 // pred_region
        _
      $region28: #{tpu_custom_call.1} parent=11 // pred_fallthru
        _
    $region12: #{tpu_custom_call.1} parent=5 // pred_fallthru
      _
    %p174 = scmp.lt.s32.totalorder %s11, 2
    // Predicated region
    $region29: #{tpu_custom_call.1} parent=5 // pred_check
      %p175 = pneg %p174
    $region30: #{tpu_custom_call.1} parent=5 // pred_check_branch
      %177 = sbr.rel (%p175) target = $region32
    $region31: #{tpu_custom_call.1} parent=5 // pred_region
      // Predicated region
      $region33: #{tpu_custom_call.1} parent=31 // pred_check
        %p178 = pneg %p31
      $region34: #{tpu_custom_call.1} parent=31 // pred_check_branch
        %180 = sbr.rel (%p178) target = $region36
      $region35: #{tpu_custom_call.1} parent=31 // pred_region
        %s181 = smul.u32 4, %s11
        %p182 = scmp.lt.s32.totalorder %s181, 7
        %s183 = scalar_select %p182, %s181, 7
        %s184 = smul.addr %s183, 8
        %s185 = scalar_lea.vmem %s0, %s184
        %s186 = smul.u32 4, %s11
      $region36: #{tpu_custom_call.1} parent=31 // pred_fallthru
        _
    $region32: #{tpu_custom_call.1} parent=5 // pred_fallthru
      _
    %p187 = scmp.le.s32.totalorder 1, %s11
    %p188 = scmp.lt.s32.totalorder %s11, 3
    %p189 = pnand %p187, %p188
    %p190 = pneg %p189
    // Predicated region
    $region37: #{tpu_custom_call.1} parent=5 // pred_check
      _
    $region38: #{tpu_custom_call.1} parent=5 // pred_check_branch
      %192 = sbr.rel (%p189) target = $region40
    $region39: #{tpu_custom_call.1} parent=5 // pred_region
      %s193 = ssub.s32 %s11, 1
      %s194 = smul.u32 4, %s16
      %p195 = scmp.lt.s32.totalorder %s194, 7
      %s196 = scalar_select %p195, %s194, 7
      %s197 = smul.addr %s196, 8
      %s198 = scalar_lea.vmem %s0, %s197
      %p199 = pneg %p37
      %p200 = pneg %p34
      %p201 = pneg %p58
      %p202 = pneg %p55
      %p203 = pneg %p79
      %p204 = pneg %p76
      %p205 = pneg %p100
      %p206 = pneg %p97
      %p207 = pneg %p121
      %p208 = pneg %p118
      %p209 = pneg %p147
      %p210 = pneg %p144
      %s211 = smul.u32 4, %s16
      %p212 = scmp.lt.s32.totalorder %s211, 7
      %s213 = scalar_select %p212, %s211, 7
      %s214 = smul.addr %s213, 8
      %s215 = scalar_lea.vmem %s5, %s214
      %s216 = smul.u32 4, %s16
      %p217 = scmp.lt.s32.totalorder %s216, 7
      %s218 = scalar_select %p217, %s216, 7
      %s219 = smul.addr %s218, 8
      %s220 = scalar_lea.vmem %s0, %s219
      %s221 = smul.u32 4, %s16
      %s222 = smul.u32 4, %s16
      %p223 = scmp.lt.s32.totalorder %s222, 7
      %s224 = scalar_select %p223, %s222, 7
      %s225 = smul.addr %s224, 8
      %s226 = scalar_lea.vmem %s5, %s225
      %s227 = smul.u32 4, %s16
      %v228 = vld [vmem:[%s2] sm:$0x1]
      %v229 = vld [vmem:[%s220] sm:$0xff]
      %v230 = vld [vmem:[%s220 + $0x8] sm:$0xff]
      %v231 = vld [vmem:[%s220 + $0x10] sm:$0xff]
      %v232 = vld [vmem:[%s220 + $0x18] sm:$0xff]
      %v233 = vld [vmem:[%s1] sm:$0xf]
      %235 = vset.pattern.permute.xlu0 0
      %236 = vperm.xlu0 %235, %v229
      %v237 = vpop.permute.xlu0 %236
      %240 = vset.pattern.permute.xlu0 0
      %241 = vperm.xlu0 %240, %v230
      %v242 = vpop.permute.xlu0 %241
      %245 = vset.pattern.permute.xlu0 0
      %246 = vperm.xlu0 %245, %v231
      %v247 = vpop.permute.xlu0 %246
      %250 = vset.pattern.permute.xlu0 0
      %251 = vperm.xlu0 %250, %v232
      %v252 = vpop.permute.xlu0 %251
      %v254 = vlaneseq
      %v255 = vshrl.u32 %v254, 7
      %v256 = vsub.s32 0, %v255
      %v257 = vrot.slane %v233, %v256
      %v258 = vmul.f32 %v237, %v257
      %v259 = vmul.f32 %v242, %v257
      %v260 = vmul.f32 %v247, %v257
      %v261 = vmul.f32 %v252, %v257
      %262 = vset.pattern.permute.xlu0 1
      %263 = vperm.xlu0 %262, %v229
      %v264 = vpop.permute.xlu0 %263
      %266 = vset.pattern.permute.xlu0 1
      %267 = vperm.xlu0 %266, %v230
      %v268 = vpop.permute.xlu0 %267
      %270 = vset.pattern.permute.xlu0 1
      %271 = vperm.xlu0 %270, %v231
      %v272 = vpop.permute.xlu0 %271
      %274 = vset.pattern.permute.xlu0 1
      %275 = vperm.xlu0 %274, %v232
      %v276 = vpop.permute.xlu0 %275
      %v278 = vlaneseq
      %v279 = vshrl.u32 %v278, 7
      %v280 = vsub.s32 1, %v279
      %v281 = vrot.slane %v233, %v280
      %v282 = vmul.f32 %v264, %v281
      %v283 = vmul.f32 %v268, %v281
      %v284 = vmul.f32 %v272, %v281
      %v285 = vmul.f32 %v276, %v281
      %v286 = vadd.f32 %v258, %v282
      %v287 = vadd.f32 %v259, %v283
      %v288 = vadd.f32 %v260, %v284
      %v289 = vadd.f32 %v261, %v285
      %290 = vset.pattern.permute.xlu0 2
      %291 = vperm.xlu0 %290, %v229
      %v292 = vpop.permute.xlu0 %291
      %294 = vset.pattern.permute.xlu0 2
      %295 = vperm.xlu0 %294, %v230
      %v296 = vpop.permute.xlu0 %295
      %298 = vset.pattern.permute.xlu0 2
      %299 = vperm.xlu0 %298, %v231
      %v300 = vpop.permute.xlu0 %299
      %302 = vset.pattern.permute.xlu0 2
      %303 = vperm.xlu0 %302, %v232
      %v304 = vpop.permute.xlu0 %303
      %v306 = vlaneseq
      %v307 = vshrl.u32 %v306, 7
      %v308 = vsub.s32 2, %v307
      %v309 = vrot.slane %v233, %v308
      %v310 = vmul.f32 %v292, %v309
      %v311 = vmul.f32 %v296, %v309
      %v312 = vmul.f32 %v300, %v309
      %v313 = vmul.f32 %v304, %v309
      %v314 = vadd.f32 %v286, %v310
      %v315 = vadd.f32 %v287, %v311
      %v316 = vadd.f32 %v288, %v312
      %v317 = vadd.f32 %v289, %v313
      %318 = vset.pattern.permute.xlu0 3
      %319 = vperm.xlu0 %318, %v229
      %v320 = vpop.permute.xlu0 %319
      %322 = vset.pattern.permute.xlu0 3
      %323 = vperm.xlu0 %322, %v230
      %v324 = vpop.permute.xlu0 %323
      %326 = vset.pattern.permute.xlu0 3
      %327 = vperm.xlu0 %326, %v231
      %v328 = vpop.permute.xlu0 %327
      %330 = vset.pattern.permute.xlu0 3
      %331 = vperm.xlu0 %330, %v232
      %v332 = vpop.permute.xlu0 %331
      %v334 = vlaneseq
      %v335 = vshrl.u32 %v334, 7
      %v336 = vsub.s32 3, %v335
      %v337 = vrot.slane %v233, %v336
      %v338 = vmul.f32 %v320, %v337
      %v339 = vmul.f32 %v324, %v337
      %v340 = vmul.f32 %v328, %v337
      %v341 = vmul.f32 %v332, %v337
      %v342 = vadd.f32 %v314, %v338
      %v343 = vadd.f32 %v315, %v339
      %v344 = vadd.f32 %v316, %v340
      %v345 = vadd.f32 %v317, %v341
      %v347 = vlaneseq
      %v348 = vshrl.u32 %v347, 7
      %v349 = vsub.s32 0, %v348
      %v350 = vrot.slane %v228, %v349
      %v352 = vadd.f32 %v342, %v350
      %v353 = vadd.f32 %v343, %v350
      %v354 = vadd.f32 %v344, %v350
      %v355 = vadd.f32 %v345, %v350
      %vm356 = vcmask 261120
      %v357 = vsel %vm356, %v352, 0.0
      %358 = vadd.xlane.f32.xlu0 %v357
      %v359 = vpop.xlane.xlu0 %358
      %v360 = vsel %vm356, %v353, 0.0
      %361 = vadd.xlane.f32.xlu0 %v360
      %v362 = vpop.xlane.xlu0 %361
      %v363 = vsel %vm356, %v354, 0.0
      %364 = vadd.xlane.f32.xlu0 %v363
      %v365 = vpop.xlane.xlu0 %364
      %v366 = vsel %vm356, %v355, 0.0
      %367 = vadd.xlane.f32.xlu0 %v366
      %v368 = vpop.xlane.xlu0 %367
      %v369 = vrcp.pop 32.0
      %v370 = vmul.f32 %v359, %v369
      %v371 = vmul.f32 %v362, %v369
      %v372 = vmul.f32 %v365, %v369
      %v373 = vmul.f32 %v368, %v369
      %v374 = vsub.f32 %v352, %v370
      %v375 = vsub.f32 %v353, %v371
      %v376 = vsub.f32 %v354, %v372
      %v377 = vsub.f32 %v355, %v373
      %v378 = vmul.f32 %v374, %v374
      %v379 = vmul.f32 %v375, %v375
      %v380 = vmul.f32 %v376, %v376
      %v381 = vmul.f32 %v377, %v377
      %v382 = vsel %vm356, %v378, 0.0
      %383 = vadd.xlane.f32.xlu0 %v382
      %v384 = vpop.xlane.xlu0 %383
      %v385 = vsel %vm356, %v379, 0.0
      %386 = vadd.xlane.f32.xlu0 %v385
      %v387 = vpop.xlane.xlu0 %386
      %v388 = vsel %vm356, %v380, 0.0
      %389 = vadd.xlane.f32.xlu0 %v388
      %v390 = vpop.xlane.xlu0 %389
      %v391 = vsel %vm356, %v381, 0.0
      %392 = vadd.xlane.f32.xlu0 %v391
      %v393 = vpop.xlane.xlu0 %392
      %v394 = vmul.f32 %v384, %v369
      %v395 = vmul.f32 %v387, %v369
      %v396 = vmul.f32 %v390, %v369
      %v397 = vmul.f32 %v393, %v369
      %v398 = vadd.f32 %v394, 1e-05
      %v399 = vadd.f32 %v395, 1e-05
      %v400 = vadd.f32 %v396, 1e-05
      %v401 = vadd.f32 %v397, 1e-05
      %v402 = vrsqrt.pop %v398
      %v403 = vrsqrt.pop %v399
      %v404 = vrsqrt.pop %v400
      %v405 = vrsqrt.pop %v401
      %v406 = vmul.f32 %v374, %v402
      %v407 = vmul.f32 %v375, %v403
      %v408 = vmul.f32 %v376, %v404
      %v409 = vmul.f32 %v377, %v405
      %v410 = vld [vmem:[%s3] sm:$0x1]
      %v412 = vlaneseq
      %v413 = vshrl.u32 %v412, 7
      %v414 = vsub.s32 0, %v413
      %v415 = vrot.slane %v410, %v414
      %v417 = vmul.f32 %v406, %v415
      %v418 = vmul.f32 %v407, %v415
      %v419 = vmul.f32 %v408, %v415
      %v420 = vmul.f32 %v409, %v415
      %v421 = vld [vmem:[%s4] sm:$0x1]
      %v423 = vlaneseq
      %v424 = vshrl.u32 %v423, 7
      %v425 = vsub.s32 0, %v424
      %v426 = vrot.slane %v421, %v425
      %v428 = vadd.f32 %v417, %v426
      %v429 = vadd.f32 %v418, %v426
      %v430 = vadd.f32 %v419, %v426
      %v431 = vadd.f32 %v420, %v426
      %432 = vst.msk [vmem:[%s226] sm:$0xff] %vm356, %v428
      %433 = vst.msk [vmem:[%s226 + $0x8] sm:$0xff] %vm356, %v429
      %434 = vst.msk [vmem:[%s226 + $0x10] sm:$0xff] %vm356, %v430
      %435 = vst.msk [vmem:[%s226 + $0x18] sm:$0xff] %vm356, %v431
      %s436 = smul.u32 4, %s16
      %p437 = scmp.lt.s32.totalorder %s436, 7
      %s438 = scalar_select %p437, %s436, 7
      %s439 = smul.addr %s438, 8
      %s440 = scalar_lea.vmem %s5, %s439
      // Predicated region
      $region41: #{tpu_custom_call.1} parent=39 // pred_check
        %p441 = pneg %p144
      $region42: #{tpu_custom_call.1} parent=39 // pred_check_branch
        %443 = sbr.rel (%p441) target = $region44
      $region43: #{tpu_custom_call.1} parent=39 // pred_region
        %s444 = smul.u32 4, %s16
      $region44: #{tpu_custom_call.1} parent=39 // pred_fallthru
        _
    $region40: #{tpu_custom_call.1} parent=5 // pred_fallthru
      _
    %p445 = scmp.le.s32.totalorder 2, %s11
    // Predicated region
    $region45: #{tpu_custom_call.1} parent=5 // pred_check
      %p446 = pneg %p445
    $region46: #{tpu_custom_call.1} parent=5 // pred_check_branch
      %448 = sbr.rel (%p446) target = $region48
    $region47: #{tpu_custom_call.1} parent=5 // pred_region
      %s449 = ssub.s32 %s11, 2
      // Predicated region
      $region49: #{tpu_custom_call.1} parent=47 // pred_check
        %p450 = pneg %p150
      $region50: #{tpu_custom_call.1} parent=47 // pred_check_branch
        %452 = sbr.rel (%p450) target = $region52
      $region51: #{tpu_custom_call.1} parent=47 // pred_region
        %s453 = smul.u32 4, %s17
        %p454 = scmp.lt.s32.totalorder %s453, 7
        %s455 = scalar_select %p454, %s453, 7
        %s456 = smul.addr %s455, 8
        %s457 = scalar_lea.vmem %s5, %s456
      $region52: #{tpu_custom_call.1} parent=47 // pred_fallthru
        _
    $region48: #{tpu_custom_call.1} parent=5 // pred_fallthru
      _
  $region6: #{tpu_custom_call.1} parent=0 // loop_footer
    %s15 = sadd.s32 1, %s11
  $region7: #{tpu_custom_call.1} parent=0 // loop_footer_branch
    %10 = sbr.rel target = $region3
  $region8: #{tpu_custom_call.1} parent=0 // loop_exit
    _

</llo_original>
